<compile_context>
chip_gen: v5e
topology: v5e:2x2
jax: 0.10.0
libtpu: 0.0.40
codegen_flags: <defaults>
</compile_context>

<pallas_src>
import functools

import jax
import jax.numpy as jnp
from jax.experimental import pallas as pl
from jax.experimental.pallas import tpu as pltpu


def rotary_kernel(inv_freq_ref, out_ref, *, tile_seq):
    # Absolute position of every row of this tile, built on-chip (no HBM table).
    pos = pl.program_id(0) * tile_seq + jax.lax.broadcasted_iota(
        jnp.int32, out_ref.shape, 0)
    # emb[i, j] = position(i) * inv_freq_cat(j): one broadcasted VPU multiply.
    out_ref[...] = pos.astype(jnp.float32) * inv_freq_ref[...]


def rotary_embedding_forward(x, seq_len, dim, *, max_tile_seq=512):
    """Pallas equivalent of RotaryEmbedding.forward(x, seq_len) -> (1, L, 1, dim)."""
    del x  # TODO(synk): in PyTorch `x` only supplies .device; no data is used.
    assert dim % 2 == 0, "rotary dim must be even"

    # Host-side constants, computed exactly as the reference module does.
    inv_freq = 1.0 / (10000.0 ** (jnp.arange(0, dim, 2, dtype=jnp.float32) / dim))
    inv_freq_cat = jnp.concatenate([inv_freq, inv_freq]).reshape(1, dim)

    # One big lane-dense tile if the whole table fits, otherwise 512-row tiles
    # (multiple of 8 sublanes) with a cdiv grid and masked tail writes.
    tile_seq = seq_len if seq_len <= max_tile_seq else max_tile_seq
    grid = (pl.cdiv(seq_len, tile_seq),)

    emb = pl.pallas_call(
        functools.partial(rotary_kernel, tile_seq=tile_seq),
        out_shape=jax.ShapeDtypeStruct((seq_len, dim), jnp.float32),
        grid_spec=pltpu.PrefetchScalarGridSpec(
            num_scalar_prefetch=0,
            grid=grid,
            in_specs=[
                # Constant block index -> fetched once, resident in VMEM.
                pl.BlockSpec((1, dim), lambda i: (0, 0)),
            ],
            out_specs=pl.BlockSpec((tile_seq, dim), lambda i: (i, 0)),
        ),
        compiler_params=pltpu.CompilerParams(
            dimension_semantics=("parallel",)),
    )(inv_freq_cat)

    return emb[None, :, None, :]


def rotary_reference(seq_len, dim):
    """Pure-JAX mirror of the PyTorch forward (for verification)."""
    inv_freq = 1.0 / (10000.0 ** (jnp.arange(0, dim, 2, dtype=jnp.float32) / dim))
    t = jnp.arange(seq_len, dtype=jnp.float32)
    freqs = jnp.einsum('i,j->ij', t, inv_freq)
    emb = jnp.concatenate([freqs, freqs], axis=-1)
    return emb[None, :, None, :]


if __name__ == "__main__":
    key = jax.random.PRNGKey(0)

    # Small shape consistent with the module: x = (batch, seq, heads, head_dim).
    B, L, H, Dh = 2, 8, 4, 32
    x = jax.random.normal(key, (B, L, H, Dh), dtype=jnp.float32)

    out = rotary_embedding_forward(x, seq_len=L, dim=Dh)
    out = jax.block_until_ready(out)
    ref = rotary_reference(L, Dh)
    assert out.shape == (1, L, 1, Dh), out.shape
    assert jnp.allclose(out, ref, rtol=1e-6, atol=1e-6), (
        float(jnp.max(jnp.abs(out - ref))))

    # Larger case exercising the multi-step pipelined grid (tile_seq=512).
    L2, Dh2 = 2048, 64
    out2 = rotary_embedding_forward(x, seq_len=L2, dim=Dh2)
    out2 = jax.block_until_ready(out2)
    ref2 = rotary_reference(L2, Dh2)
    assert out2.shape == (1, L2, 1, Dh2), out2.shape
    assert jnp.allclose(out2, ref2, rtol=1e-6, atol=1e-6), (
        float(jnp.max(jnp.abs(out2 - ref2))))

    print("KERNEL_OK")
</pallas_src>

<mosaic_0001>
module attributes {stable_mosaic.version = 11 : i64} {
  func.func @rotary_kernel(%arg0: i32, %arg1: memref<1x32xf32, #tpu.memory_space<vmem>>, %arg2: memref<8x32xf32, #tpu.memory_space<vmem>>) attributes {dimension_semantics = [#tpu.dimension_semantics<parallel>], iteration_bounds = array<i64: 1>, scalar_prefetch = 0 : i64, scratch_operands = 0 : i64, tpu.core_type = #tpu.core_type<tc>, window_params = [{pipeline_mode = #tpu.pipeline_mode<synchronous>, transform_indices = @transform_0, window_bounds = array<i64: 1, 32>}, {transform_indices = @transform_1, window_bounds = array<i64: 8, 32>}]} {
    %c8_i32 = arith.constant 8 : i32
    %0 = arith.muli %arg0, %c8_i32 : i32
    %1 = tpu.iota {dimensions = array<i32: 0>} : vector<8x32xi32>
    %2 = vector.broadcast %0 : i32 to vector<8x32xi32>
    %3 = arith.addi %2, %1 : vector<8x32xi32>
    %4 = arith.sitofp %3 : vector<8x32xi32> to vector<8x32xf32>
    %c0 = arith.constant 0 : index
    %c0_0 = arith.constant 0 : index
    %5 = vector.load %arg1[%c0, %c0_0] : memref<1x32xf32, #tpu.memory_space<vmem>>, vector<1x32xf32>
    %6 = vector.broadcast %5 : vector<1x32xf32> to vector<8x32xf32>
    %7 = arith.mulf %4, %6 : vector<8x32xf32>
    %c0_1 = arith.constant 0 : index
    %c0_2 = arith.constant 0 : index
    %8 = vector.load %arg2[%c0_1, %c0_2] : memref<8x32xf32, #tpu.memory_space<vmem>>, vector<8x32xf32>
    tpu.vector_store %arg2[%c0_1, %c0_2], %7 {strides = array<i32>} : memref<8x32xf32, #tpu.memory_space<vmem>>, vector<8x32xf32>,
    return
  }
  func.func @transform_0(%arg0: i32) -> (i32, i32) {
    %c0_i32 = arith.constant 0 : i32
    %c0_i32_0 = arith.constant 0 : i32
    %c0_i32_1 = arith.constant 0 : i32
    return %c0_i32, %c0_i32_0 : i32, i32
  }
  func.func @transform_1(%arg0: i32) -> (i32, i32) {
    %c0_i32 = arith.constant 0 : i32
    %c0_i32_0 = arith.constant 0 : i32
    return %arg0, %c0_i32 : i32, i32
  }
}

</mosaic_0001>

<llo_original>
// kernel: tpu_custom_call.1
$region0: #{tpu_custom_call.1}
  #allocation0 [shape = 'u32[]', space=smem, size = 0x4, offset = 0x4, fixed_abs, tag = 'smem constant byte address 0x4 - core index']
  #allocation1 [shape = 'u32[72,128]{1,0:T(1,128)}', space=vmem, size = 0x9000, scoped, tag = 'internal scratch']
  %s0 = inlined_call_operand.hbm [shape: f32[1,32], index: 0, kind: input, shape index: {}]
  %s1 = inlined_call_operand.hbm [shape: f32[8,32], index: 1, kind: output, shape index: {}]
  %s2 = sld [smem:[#allocation0]]
  $region18: #{tpu_custom_call.1} parent=0
    _
  %s4 = ssub.s32 1, %s2
  %s5 = scalar_select 0, %s4, %s2
  $region1: #{tpu_custom_call.1} parent=0
    #allocation2 [shape = 'u8[512]{0}', space=vmem, size = 0x400, scoped, tag = 'input window, operand 0, single buffered']
    #allocation3 [shape = 's32[1]{0}', space=sflag, size = 0x4, scoped, tag = 'scoped memory for tpu_custom_call.1']
    #allocation4 [shape = 's32[1]{0}', space=sflag, size = 0x4, scoped, tag = 'scoped memory for tpu_custom_call.1']
    #allocation5 [shape = 'u8[4096]{0}', space=vmem, size = 0x1000, scoped, tag = 'output window, operand 0, single buffered']
    %6 = vsyncpa [#allocation3], 0
    %7 = vsyncpa [#allocation4], 0
    // Predicated region
    $region2: #{tpu_custom_call.1} parent=1 // pred_check
      _
    $region3: #{tpu_custom_call.1} parent=1 // pred_check_branch
      %9 = sbr.rel (0) target = $region5
    $region4: #{tpu_custom_call.1} parent=1 // pred_region
      %11 = vsyncadd [#allocation3], 0
      %s13 = sshll.u32 %s0, 4
      %s14 = int_to_ptr.hbm [resolvable:$true] %s13
      %s15 = sshll.u32 [#allocation2], 4
      %s16 = int_to_ptr.vmem [resolvable:$true] %s15
      %18 = dma.hbm_to_vmem [thread:$0]  %s14, 16, %s16, [#allocation3]
    $region5: #{tpu_custom_call.1} parent=1 // pred_fallthru
      _
    // Predicated region
    $region6: #{tpu_custom_call.1} parent=1 // pred_check
      _
    $region7: #{tpu_custom_call.1} parent=1 // pred_check_branch
      %20 = sbr.rel (0) target = $region9
    $region8: #{tpu_custom_call.1} parent=1 // pred_region
      %22 = dma.done [#allocation3], 16
    $region9: #{tpu_custom_call.1} parent=1 // pred_fallthru
      _
    %s23 = smul.u32 0, 8
    %v24 = vlaneseq
    %v25 = vshrl.u32 %v24, 7
    %v26 = vstv %s23
    %v27 = vadd.s32 %v26, %v25
    %v28 = vcvt.s32.f32 %v27
    %v29 = vld [vmem:[#allocation2] sm:$0x1]
    %v31 = vperm.slane %v29, 0
    %v33 = vmul.f32 %v28, %v31
    %vm34 = vcmask 261120
    %35 = vst.msk [vmem:[#allocation5] sm:$0xff] %vm34, %v33
    // Predicated region
    $region10: #{tpu_custom_call.1} parent=1 // pred_check
      _
    $region11: #{tpu_custom_call.1} parent=1 // pred_check_branch
      %37 = sbr.rel (0) target = $region13
    $region12: #{tpu_custom_call.1} parent=1 // pred_region
      %39 = vsyncadd [#allocation4], 0
      %s41 = sshll.u32 [#allocation5], 4
      %s42 = int_to_ptr.vmem [resolvable:$true] %s41
      %s43 = sshll.u32 %s1, 4
      %s44 = int_to_ptr.hbm [resolvable:$true] %s43
      %46 = dma.vmem_to_hbm [thread:$0]  %s42, 128, %s44, [#allocation4]
    $region13: #{tpu_custom_call.1} parent=1 // pred_fallthru
      _
    // Predicated region
    $region14: #{tpu_custom_call.1} parent=1 // pred_check
      _
    $region15: #{tpu_custom_call.1} parent=1 // pred_check_branch
      %48 = sbr.rel (0) target = $region17
    $region16: #{tpu_custom_call.1} parent=1 // pred_region
      %50 = dma.done [#allocation4], 128
    $region17: #{tpu_custom_call.1} parent=1 // pred_fallthru
      _
    %51 = vsyncpa [#allocation3], 1
    %52 = vsyncpa [#allocation4], 1

</llo_original>
